<compile_context>
chip_gen: v5e
topology: v5e:2x2
jax: 0.10.0
libtpu: 0.0.40
codegen_flags: <defaults>
</compile_context>

<pallas_src>
import math

import jax
import jax.numpy as jnp
from jax.experimental import pallas as pl
from jax.experimental.pallas import tpu as pltpu


def _copy_kernel(x_ref, o_ref):
    # Identity copy of the current tile (lane-dense, unmasked vld/vst).
    o_ref[...] = x_ref[...]


def view_flatten(x: jax.Array) -> jax.Array:
    """Production equivalent of PyTorch `x.view(x.size(0), -1)`.

    A row-major flatten is a layout-only metadata op: zero bytes moved.
    """
    return x.reshape(x.shape[0], -1)


def view_flatten_pallas(x: jax.Array, *, target_tile_bytes: int = 2 * 1024 * 1024) -> jax.Array:
    """Pallas identity-copy anchor with the same semantics as view_flatten().

    Only useful as a fusion/benchmark anchor — prefer view_flatten().
    """
    B = x.shape[0]
    F = math.prod(x.shape[1:]) if x.ndim > 1 else 1
    total = B * F
    dtype_bytes = jnp.dtype(x.dtype).itemsize

    if total % 128 == 0:
        # Lane-dense slab: last dim a multiple of 128 (dense vst), rows on sublanes.
        L = 128
        while total % (L * 2) == 0 and (total // (L * 2)) >= 8 and L * 2 <= 2048:
            L *= 2
        R = total // L
        x2 = x.reshape(R, L)

        # Row tile: multiple of 8, ~target_tile_bytes per step, capped at R.
        tile_r = max(8, (target_tile_bytes // (L * dtype_bytes)) // 8 * 8)
        tile_r = min(tile_r, R)
        if R % 8 != 0:
            tile_r = R  # full-extent sublane block when R isn't 8-aligned
        block = (tile_r, L)
        grid = (pl.cdiv(R, tile_r),)
        index_map = lambda j: (j, 0)
    else:
        # Fallback: tile the (B, F) view along features with a bounded cdiv grid.
        x2 = x.reshape(B, F)
        tile_f = max(128, (target_tile_bytes // max(B, 1) // dtype_bytes) // 128 * 128)
        tile_f = min(tile_f, F)
        if F % 128 != 0:
            tile_f = F
        block = (B, tile_f)
        grid = (pl.cdiv(F, tile_f),)
        index_map = lambda j: (0, j)

    out2 = pl.pallas_call(
        _copy_kernel,
        out_shape=jax.ShapeDtypeStruct(x2.shape, x2.dtype),
        grid_spec=pltpu.PrefetchScalarGridSpec(
            num_scalar_prefetch=0,
            grid=grid,
            in_specs=[pl.BlockSpec(block, index_map)],
            out_specs=pl.BlockSpec(block, index_map),
        ),
        # In-place donation: drops the second HBM allocation + writeback.
        input_output_aliases={0: 0},
        compiler_params=pltpu.CompilerParams(
            dimension_semantics=("parallel",),      # shardable across v7x's 2 TCs
            vmem_limit_bytes=32 * 1024 * 1024,      # 4x 2 MiB tiles fit comfortably
        ),
    )(x2)
    return out2.reshape(B, F)


if __name__ == "__main__":
    key = jax.random.PRNGKey(0)
    # Small NCHW feature map, consistent with the SSHead usage.
    B, C, H, W = 2, 4, 16, 16
    x = jax.random.normal(key, (B, C, H, W), dtype=jnp.float32)

    # Production path (zero-cost metadata reshape) = reference.
    y_ref = view_flatten(x)

    # Pallas anchor path (lane-dense in-place identity copy).
    y = view_flatten_pallas(x)
    y = jax.block_until_ready(y)

    assert y.shape == (B, C * H * W), y.shape
    assert y.dtype == x.dtype
    assert bool(jnp.array_equal(y, y_ref)), "mismatch vs reference flatten"

    print("KERNEL_OK")
</pallas_src>

<mosaic_0001>
module attributes {stable_mosaic.version = 11 : i64} {
  func.func @_copy_kernel(%arg0: i32, %arg1: memref<8x256xf32, #tpu.memory_space<vmem>>, %arg2: memref<8x256xf32, #tpu.memory_space<vmem>>) attributes {dimension_semantics = [#tpu.dimension_semantics<parallel>], iteration_bounds = array<i64: 1>, scalar_prefetch = 0 : i64, scratch_operands = 0 : i64, tpu.core_type = #tpu.core_type<tc>, window_params = [{transform_indices = @transform_0, window_bounds = array<i64: 8, 256>}, {transform_indices = @transform_1, window_bounds = array<i64: 8, 256>}]} {
    %c0 = arith.constant 0 : index
    %c0_0 = arith.constant 0 : index
    %0 = vector.load %arg1[%c0, %c0_0] : memref<8x256xf32, #tpu.memory_space<vmem>>, vector<8x256xf32>
    %c0_1 = arith.constant 0 : index
    %c0_2 = arith.constant 0 : index
    %1 = vector.load %arg2[%c0_1, %c0_2] : memref<8x256xf32, #tpu.memory_space<vmem>>, vector<8x256xf32>
    tpu.vector_store %arg2[%c0_1, %c0_2], %0 {strides = array<i32>} : memref<8x256xf32, #tpu.memory_space<vmem>>, vector<8x256xf32>,
    return
  }
  func.func @transform_0(%arg0: i32) -> (i32, i32) {
    %c0_i32 = arith.constant 0 : i32
    %c0_i32_0 = arith.constant 0 : i32
    return %arg0, %c0_i32 : i32, i32
  }
  func.func @transform_1(%arg0: i32) -> (i32, i32) {
    %c0_i32 = arith.constant 0 : i32
    %c0_i32_0 = arith.constant 0 : i32
    return %arg0, %c0_i32 : i32, i32
  }
}

</mosaic_0001>

<llo_original>
// kernel: tpu_custom_call.1
$region0: #{tpu_custom_call.1}
  #allocation0 [shape = 'u32[]', space=smem, size = 0x4, offset = 0x4, fixed_abs, tag = 'smem constant byte address 0x4 - core index']
  #allocation1 [shape = 'u32[72,128]{1,0:T(1,128)}', space=vmem, size = 0x9000, scoped, tag = 'internal scratch']
  %s0 = inlined_call_operand.hbm [shape: f32[8,256], index: 0, kind: input, shape index: {}, may-alias: {0,1}]
  %s1 = inlined_call_operand.hbm [shape: f32[8,256], index: 1, kind: output, shape index: {}, may-alias: {0,1}]
  %s2 = sld [smem:[#allocation0]]
  $region18: #{tpu_custom_call.1} parent=0
    _
  %s4 = ssub.s32 1, %s2
  %s5 = scalar_select 0, %s4, %s2
  $region1: #{tpu_custom_call.1} parent=0
    #allocation2 [shape = 'u8[8192]{0}', space=vmem, size = 0x2000, scoped, tag = 'input window, operand 0, single buffered']
    #allocation3 [shape = 's32[1]{0}', space=sflag, size = 0x4, scoped, tag = 'scoped memory for tpu_custom_call.1']
    #allocation4 [shape = 's32[1]{0}', space=sflag, size = 0x4, scoped, tag = 'scoped memory for tpu_custom_call.1']
    #allocation5 [shape = 'u8[8192]{0}', space=vmem, size = 0x2000, scoped, tag = 'output window, operand 0, single buffered']
    %6 = vsyncpa [#allocation3], 0
    %7 = vsyncpa [#allocation4], 0
    // Predicated region
    $region2: #{tpu_custom_call.1} parent=1 // pred_check
      _
    $region3: #{tpu_custom_call.1} parent=1 // pred_check_branch
      %9 = sbr.rel (0) target = $region5
    $region4: #{tpu_custom_call.1} parent=1 // pred_region
      %11 = vsyncadd [#allocation3], 0
      %s13 = sshll.u32 %s0, 4
      %s14 = int_to_ptr.hbm [resolvable:$true] %s13
      %s15 = sshll.u32 [#allocation2], 4
      %s16 = int_to_ptr.vmem [resolvable:$true] %s15
      %18 = dma.hbm_to_vmem [thread:$0]  %s14, 256, %s16, [#allocation3]
    $region5: #{tpu_custom_call.1} parent=1 // pred_fallthru
      _
    // Predicated region
    $region6: #{tpu_custom_call.1} parent=1 // pred_check
      _
    $region7: #{tpu_custom_call.1} parent=1 // pred_check_branch
      %20 = sbr.rel (0) target = $region9
    $region8: #{tpu_custom_call.1} parent=1 // pred_region
      %22 = dma.done [#allocation3], 256
    $region9: #{tpu_custom_call.1} parent=1 // pred_fallthru
      _
    %v23 = vld [vmem:[#allocation2] sm:$0xff]
    %v24 = vld [vmem:[#allocation2 + $0x8] sm:$0xff]
    %25 = vst [vmem:[#allocation5] sm:$0xff] %v23
    %26 = vst [vmem:[#allocation5 + $0x8] sm:$0xff] %v24
    // Predicated region
    $region10: #{tpu_custom_call.1} parent=1 // pred_check
      _
    $region11: #{tpu_custom_call.1} parent=1 // pred_check_branch
      %28 = sbr.rel (0) target = $region13
    $region12: #{tpu_custom_call.1} parent=1 // pred_region
      %30 = vsyncadd [#allocation4], 0
      %s32 = sshll.u32 [#allocation5], 4
      %s33 = int_to_ptr.vmem [resolvable:$true] %s32
      %s34 = sshll.u32 %s1, 4
      %s35 = int_to_ptr.hbm [resolvable:$true] %s34
      %37 = dma.vmem_to_hbm [thread:$0]  %s33, 256, %s35, [#allocation4]
    $region13: #{tpu_custom_call.1} parent=1 // pred_fallthru
      _
    // Predicated region
    $region14: #{tpu_custom_call.1} parent=1 // pred_check
      _
    $region15: #{tpu_custom_call.1} parent=1 // pred_check_branch
      %39 = sbr.rel (0) target = $region17
    $region16: #{tpu_custom_call.1} parent=1 // pred_region
      %41 = dma.done [#allocation4], 256
    $region17: #{tpu_custom_call.1} parent=1 // pred_fallthru
      _
    %42 = vsyncpa [#allocation3], 1
    %43 = vsyncpa [#allocation4], 1

</llo_original>
